<compile_context>
chip_gen: v7x
topology: tpu7x:2x2x1
jax: 0.10.0
libtpu: 0.0.40
codegen_flags: <defaults>
</compile_context>

<pallas_src>
import jax
import jax.numpy as jnp
from jax.experimental import pallas as pl
from jax.experimental.pallas import tpu as pltpu


def _scaled_conv_kernel(w_ref, x_ref, o_ref):
    # w_ref: (T_R, 1) pre-binarized {0,1} per-row mask; x_ref/o_ref: (T_R, T_HW).
    o_ref[...] = jnp.maximum(x_ref[...], 0.0) * w_ref[...]


def _round_up(v, m):
    return ((v + m - 1) // m) * m


def _sublane_quantum(dtype):
    itemsize = jnp.dtype(dtype).itemsize
    if itemsize == 2:
        return 16
    if itemsize == 1:
        return 32
    return 8


def scaled_conv2d(x_nchw, weight):
    """ScaledConv2D forward.

    x_nchw: (N, C, H, W); weight: (C, 1, 1, 1) raw BinaryConv2d weights.
    """
    N, C, H, W = x_nchw.shape
    HW = H * W
    dtype = x_nchw.dtype

    # Fold batch into the row (sublane) axis -- contiguous reshape, no copy.
    R = N * C
    x2 = x_nchw.reshape(R, HW)

    # Binarize the weight once; tile to one {0,1} scalar per (n, c) row.
    mask_c = (weight.reshape(-1) > 0.5).astype(dtype)      # (C,)
    mask = jnp.tile(mask_c, (N,)).reshape(R, 1)            # row n*C + c -> mask[c]

    # Tile sizes: rounded to the hardware quanta, capped so the
    # double-buffered in+out footprint (4 * T_R * T_HW * itemsize) stays well
    # under the default scoped-VMEM limit on every generation
    # (f32: 4 * 256 * 2048 * 4 B = 8 MiB).  Ragged edge blocks are handled by
    # Pallas (OOB reads never escape: the op is elementwise and edge stores
    # are masked), so no host-side padding is needed.
    sub = _sublane_quantum(dtype)
    T_R = min(_round_up(R, sub), 256)
    T_HW = min(_round_up(HW, 128), 2048)
    grid = (pl.cdiv(R, T_R), pl.cdiv(HW, T_HW))

    out = pl.pallas_call(
        _scaled_conv_kernel,
        out_shape=jax.ShapeDtypeStruct((R, HW), dtype),
        grid_spec=pltpu.PrefetchScalarGridSpec(
            num_scalar_prefetch=0,
            grid=grid,
            in_specs=[
                # Per-row {0,1} mask; constant along j, so it is only
                # re-fetched when the row tile changes.
                pl.BlockSpec((T_R, 1), lambda i, j: (i, 0)),
                # Lane-dense activation tile.
                pl.BlockSpec((T_R, T_HW), lambda i, j: (i, j)),
            ],
            out_specs=pl.BlockSpec((T_R, T_HW), lambda i, j: (i, j)),
        ),
        compiler_params=pltpu.CompilerParams(
            dimension_semantics=("parallel", "parallel")),
    )(mask, x2)

    return out.reshape(N, C, H, W)


def _reference(x_nchw, weight):
    bw = (weight > 0.5).astype(x_nchw.dtype).reshape(1, -1, 1, 1)
    return jnp.maximum(x_nchw, 0.0) * bw


if __name__ == "__main__":
    key = jax.random.PRNGKey(0)
    kx, kw = jax.random.split(key)

    N, C, H, W = 2, 4, 16, 16
    x = jax.random.normal(kx, (N, C, H, W), dtype=jnp.float32)
    # Module __init__ sets weight = 1.0 everywhere; use uniform values instead
    # so the (w > 0.5) binarization path produces a mix of 0s and 1s.
    weight = jax.random.uniform(kw, (C, 1, 1, 1), dtype=jnp.float32)

    y = jax.block_until_ready(scaled_conv2d(x, weight))
    y_ref = _reference(x, weight)

    assert y.shape == (N, C, H, W)
    assert jnp.allclose(y, y_ref, atol=1e-6, rtol=1e-6)
    print("KERNEL_OK")
</pallas_src>

<mosaic_0001>
module attributes {stable_mosaic.version = 11 : i64} {
  func.func @_scaled_conv_kernel(%arg0: i32, %arg1: i32, %arg2: memref<8x1xf32, #tpu.memory_space<vmem>>, %arg3: memref<8x256xf32, #tpu.memory_space<vmem>>, %arg4: memref<8x256xf32, #tpu.memory_space<vmem>>) attributes {dimension_semantics = [#tpu.dimension_semantics<parallel>, #tpu.dimension_semantics<parallel>], iteration_bounds = array<i64: 1, 1>, scalar_prefetch = 0 : i64, scratch_operands = 0 : i64, tpu.core_type = #tpu.core_type<tc>, window_params = [{transform_indices = @transform_0, window_bounds = array<i64: 8, 1>}, {transform_indices = @transform_1, window_bounds = array<i64: 8, 256>}, {transform_indices = @transform_2, window_bounds = array<i64: 8, 256>}]} {
    %c0 = arith.constant 0 : index
    %c0_0 = arith.constant 0 : index
    %0 = vector.load %arg3[%c0, %c0_0] : memref<8x256xf32, #tpu.memory_space<vmem>>, vector<8x256xf32>
    %cst = arith.constant 0.000000e+00 : f32
    %1 = vector.broadcast %cst : f32 to vector<8x256xf32>
    %2 = arith.maximumf %0, %1 : vector<8x256xf32>
    %c0_1 = arith.constant 0 : index
    %c0_2 = arith.constant 0 : index
    %3 = vector.load %arg2[%c0_1, %c0_2] : memref<8x1xf32, #tpu.memory_space<vmem>>, vector<8x1xf32>
    %4 = vector.broadcast %3 : vector<8x1xf32> to vector<8x256xf32>
    %5 = arith.mulf %2, %4 : vector<8x256xf32>
    %c0_3 = arith.constant 0 : index
    %c0_4 = arith.constant 0 : index
    %6 = vector.load %arg4[%c0_3, %c0_4] : memref<8x256xf32, #tpu.memory_space<vmem>>, vector<8x256xf32>
    tpu.vector_store %arg4[%c0_3, %c0_4], %5 {strides = array<i32>} : memref<8x256xf32, #tpu.memory_space<vmem>>, vector<8x256xf32>,
    return
  }
  func.func @transform_0(%arg0: i32, %arg1: i32) -> (i32, i32) {
    %c0_i32 = arith.constant 0 : i32
    %c0_i32_0 = arith.constant 0 : i32
    return %arg0, %c0_i32 : i32, i32
  }
  func.func @transform_1(%arg0: i32, %arg1: i32) -> (i32, i32) {
    %c0_i32 = arith.constant 0 : i32
    return %arg0, %arg1 : i32, i32
  }
  func.func @transform_2(%arg0: i32, %arg1: i32) -> (i32, i32) {
    %c0_i32 = arith.constant 0 : i32
    return %arg0, %arg1 : i32, i32
  }
}

</mosaic_0001>

<llo_original>
// kernel: tpu_custom_call.1
$region0: #{tpu_custom_call.1}
  #allocation0 [shape = 'u32[]', space=smem, size = 0x4, offset = 0x4, fixed_abs, tag = 'smem constant byte address 0x4 - core index']
  #allocation1 [shape = 'u32[144,128]{1,0:T(1,128)}', space=vmem, size = 0x12000, scoped, tag = 'internal scratch']
  %s0 = inlined_call_operand.vmem [shape: f32[8,1], index: 0, kind: input, shape index: {}]
  %s1 = inlined_call_operand.hbm [shape: f32[8,256], index: 1, kind: input, shape index: {}]
  %s2 = inlined_call_operand.hbm [shape: f32[8,256], index: 2, kind: output, shape index: {}]
  %s3 = sld [smem:[#allocation0]]
  $region22: #{tpu_custom_call.1} parent=0
    _
  %s5 = ssub.s32 1, %s3
  %s6 = scalar_select 0, %s5, %s3
  $region1: #{tpu_custom_call.1} parent=0
    #allocation2 [shape = 'u8[8192]{0}', space=vmem, size = 0x2000, scoped, tag = 'input window, operand 1, single buffered']
    #allocation3 [shape = 's32[1]{0}', space=sflag, size = 0x4, scoped, tag = 'scoped memory for tpu_custom_call.1']
    #allocation4 [shape = 's32[1]{0}', space=sflag, size = 0x4, scoped, tag = 'scoped memory for tpu_custom_call.1']
    #allocation5 [shape = 'u8[8192]{0}', space=vmem, size = 0x2000, scoped, tag = 'output window, operand 0, single buffered']
    %7 = vsyncpa [#allocation3], 0
    %8 = vsyncpa [#allocation4], 0
    // Predicated region
    $region2: #{tpu_custom_call.1} parent=1 // pred_check
      _
    $region3: #{tpu_custom_call.1} parent=1 // pred_check_branch
      %10 = sbr.rel (0) target = $region5
    $region4: #{tpu_custom_call.1} parent=1 // pred_region
      _
    $region5: #{tpu_custom_call.1} parent=1 // pred_fallthru
      _
    // Predicated region
    $region6: #{tpu_custom_call.1} parent=1 // pred_check
      _
    $region7: #{tpu_custom_call.1} parent=1 // pred_check_branch
      %12 = sbr.rel (0) target = $region9
    $region8: #{tpu_custom_call.1} parent=1 // pred_region
      %s14 = ssub.s32 256, 256
      %15 = vsyncadd [#allocation3], %s14
      %s17 = sshll.u32 [#allocation2], 4
      %s18 = int_to_ptr.vmem [resolvable:$true] %s17
      %20 = dma.hbm_to_vmem [thread:$0]  %s1, 256, %s18, [#allocation3]
    $region9: #{tpu_custom_call.1} parent=1 // pred_fallthru
      _
    // Predicated region
    $region10: #{tpu_custom_call.1} parent=1 // pred_check
      _
    $region11: #{tpu_custom_call.1} parent=1 // pred_check_branch
      %22 = sbr.rel (0) target = $region13
    $region12: #{tpu_custom_call.1} parent=1 // pred_region
      %23 = dma.done [#allocation3], 256
    $region13: #{tpu_custom_call.1} parent=1 // pred_fallthru
      _
    %v24 = vld [vmem:[#allocation2] sm:$0xff]
    %v25 = vld [vmem:[#allocation2 + $0x8] sm:$0xff]
    %v26 = vmax.f32 %v24, 0.0
    %v27 = vmax.f32 %v25, 0.0
    %v28 = vld [vmem:[%s0] sm:$0xff]
    %30 = vset.pattern.permute.xlu0 0
    %31 = vperm.xlu0 %30, %v28
    %v32 = vpop.permute.xlu0 %31
    %v34 = vmul.f32 %v26, %v32
    %v35 = vmul.f32 %v27, %v32
    %36 = vst [vmem:[#allocation5] sm:$0xff] %v34
    %37 = vst [vmem:[#allocation5 + $0x8] sm:$0xff] %v35
    // Predicated region
    $region14: #{tpu_custom_call.1} parent=1 // pred_check
      _
    $region15: #{tpu_custom_call.1} parent=1 // pred_check_branch
      %39 = sbr.rel (0) target = $region17
    $region16: #{tpu_custom_call.1} parent=1 // pred_region
      %s41 = ssub.s32 256, 256
      %42 = vsyncadd [#allocation4], %s41
      %s44 = sshll.u32 [#allocation5], 4
      %s45 = int_to_ptr.vmem [resolvable:$true] %s44
      %47 = dma.vmem_to_hbm [thread:$0]  %s45, 256, %s2, [#allocation4]
    $region17: #{tpu_custom_call.1} parent=1 // pred_fallthru
      _
    // Predicated region
    $region18: #{tpu_custom_call.1} parent=1 // pred_check
      _
    $region19: #{tpu_custom_call.1} parent=1 // pred_check_branch
      %49 = sbr.rel (0) target = $region21
    $region20: #{tpu_custom_call.1} parent=1 // pred_region
      %50 = dma.done [#allocation4], 256
    $region21: #{tpu_custom_call.1} parent=1 // pred_fallthru
      _
    %51 = vsyncpa [#allocation3], 1
    %52 = vsyncpa [#allocation4], 1

</llo_original>
